<compile_context>
chip_gen: v7x
topology: tpu7x:2x2x1
jax: 0.10.0
libtpu: 0.0.40
codegen_flags: <defaults>
</compile_context>

<pallas_src>
import jax
import jax.numpy as jnp
from jax.experimental import pallas as pl
from jax.experimental.pallas import tpu as pltpu

_LANES = 128                          # vreg lane width (fast axis)
_TARGET_BLOCK_BYTES = 4 * 1024 * 1024 # ~4 MiB per block; 2x(in+out) = 16 MiB
_VMEM_LIMIT_BYTES = 32 * 1024 * 1024  # explicit scoped-VMEM limit (safe on
                                      # v5e/v6e [128 MiB phys] and v7x [64 MiB])


def _features_kernel(obs_ref, out_ref):
    # Identity feature pass (SB3 FlattenExtractor semantics).  Real
    # subclasses would place per-feature compute here.
    out_ref[...] = obs_ref[...]


def _round_down(x, m):
    return (x // m) * m


def _streaming_copy_2d(x2d):
    """One HBM read + one HBM write of a 2D array through the Pallas kernel."""
    r, c = x2d.shape
    item = x2d.dtype.itemsize
    # Sublane quantum per dtype: 8 (4-byte), 16 (2-byte), 32 (1-byte).
    quantum = max(8, 32 // item)

    # Lane (last-dim) tile: full dim when a quantum-row slab fits the budget,
    # otherwise a 128-multiple chunk (boundary block masked by Pallas).
    if c * quantum * item <= _TARGET_BLOCK_BYTES:
        block_c = c
    else:
        block_c = max(_LANES,
                      _round_down(_TARGET_BLOCK_BYTES // (quantum * item), _LANES))

    # Sublane (second-to-last) tile: stay under the block-byte budget, but aim
    # for >= 4 grid steps so the pipeline overlaps DMA-in / copy / DMA-out.
    if r <= 4 * quantum:
        block_r = r                    # tiny input: single whole-array block
    else:
        rows_budget = max(quantum,
                          _round_down(_TARGET_BLOCK_BYTES // (block_c * item), quantum))
        rows_quarter = max(quantum, _round_down(r // 4, quantum))
        block_r = min(rows_budget, rows_quarter)

    grid = (pl.cdiv(r, block_r), pl.cdiv(c, block_c))

    return pl.pallas_call(
        _features_kernel,
        out_shape=jax.ShapeDtypeStruct((r, c), x2d.dtype),
        grid=grid,
        in_specs=[pl.BlockSpec((block_r, block_c), lambda i, j: (i, j))],
        out_specs=pl.BlockSpec((block_r, block_c), lambda i, j: (i, j)),
        compiler_params=pltpu.CompilerParams(
            # TODO(synk): if a trace shows one v7x TensorCore cannot saturate
            # HBM, switch the row axis to pltpu.CORE_PARALLEL.
            dimension_semantics=("parallel", "parallel"),
            vmem_limit_bytes=_VMEM_LIMIT_BYTES,
        ),
    )(x2d)


@jax.jit
def _flatten_extract(observations):
    """Flatten (B, ...) -> (B, F); hot path streams once through Pallas."""
    b = observations.shape[0]
    flat = observations.reshape(b, -1)       # free metadata reshape
    f = flat.shape[1]
    total = b * f

    if total % _LANES == 0:
        # Lane-dense fold: every vreg is full (no masked lane stores).
        x2d = flat.reshape(total // _LANES, _LANES)
    else:
        # Ragged feature count: tile the (B, F) view directly; the feature
        # axis stays a full-dim lane block, boundary rows are masked in-kernel.
        x2d = flat

    out2d = _streaming_copy_2d(x2d)
    return out2d.reshape(b, f)


class BaseFeaturesExtractor:
    """JAX/Pallas port of stable_baselines3 BaseFeaturesExtractor.

    :param observation_shape: shape of a single observation (no batch dim),
        e.g. (C, H, W) for image observations (NCHW convention).
    :param features_dim: number of features extracted (> 0).
    """

    def __init__(self, observation_shape, features_dim: int = 0):
        assert features_dim > 0
        self._observation_shape = tuple(observation_shape)
        self._features_dim = int(features_dim)
        # No learnable parameters in the base class (matches an nn.Module with
        # no registered parameters) — nothing to initialize.

    @property
    def features_dim(self) -> int:
        return self._features_dim

    def forward(self, observations: jnp.ndarray) -> jnp.ndarray:
        # TODO(synk): forward() raises NotImplementedError in the PyTorch base
        # class; we implement SB3's canonical FlattenExtractor behaviour here.
        f = 1
        for d in observations.shape[1:]:
            f *= d
        assert f == self._features_dim, (
            f"observation flattens to {f} features, expected {self._features_dim}"
        )
        return _flatten_extract(observations)

    __call__ = forward


if __name__ == "__main__":
    key = jax.random.PRNGKey(0)

    # 1) Small image-like observation space: (C, H, W) = (4, 16, 16), batch=2.
    #    total = 2048 elements -> lane-dense fold, single whole block.
    obs_shape = (4, 16, 16)
    features_dim = 4 * 16 * 16  # 1024
    observations = jax.random.normal(key, (2,) + obs_shape, dtype=jnp.float32)

    extractor = BaseFeaturesExtractor(obs_shape, features_dim=features_dim)
    feats = jax.block_until_ready(extractor(observations))

    ref = observations.reshape(observations.shape[0], -1)
    assert feats.shape == (2, features_dim)
    assert feats.dtype == observations.dtype
    assert bool(jnp.array_equal(feats, ref))

    # 2) Atari-sized observations, batch=16: exercises the multi-block grid
    #    (rows=3528, 5 blocks) including a masked partial boundary block,
    #    with no wrapper-side pad or slice.
    obs_shape2 = (4, 84, 84)
    features_dim2 = 4 * 84 * 84  # 28224
    observations2 = jax.random.normal(
        jax.random.PRNGKey(0), (16,) + obs_shape2, dtype=jnp.float32
    )
    extractor2 = BaseFeaturesExtractor(obs_shape2, features_dim=features_dim2)
    feats2 = jax.block_until_ready(extractor2(observations2))
    ref2 = observations2.reshape(observations2.shape[0], -1)
    assert feats2.shape == (16, features_dim2)
    assert bool(jnp.array_equal(feats2, ref2))

    # 3) Ragged case: batch*features not a multiple of 128 -> direct (B, F)
    #    tiling path, no padding anywhere.
    obs_shape3 = (3, 5, 7)
    features_dim3 = 3 * 5 * 7  # 105
    observations3 = jax.random.normal(
        jax.random.PRNGKey(0), (3,) + obs_shape3, dtype=jnp.float32
    )
    extractor3 = BaseFeaturesExtractor(obs_shape3, features_dim=features_dim3)
    feats3 = jax.block_until_ready(extractor3(observations3))
    ref3 = observations3.reshape(observations3.shape[0], -1)
    assert feats3.shape == (3, features_dim3)
    assert bool(jnp.array_equal(feats3, ref3))

    print("KERNEL_OK")
</pallas_src>

<mosaic_0001>
module attributes {stable_mosaic.version = 11 : i64} {
  func.func @_features_kernel(%arg0: i32, %arg1: i32, %arg2: memref<16x128xf32, #tpu.memory_space<vmem>>, %arg3: memref<16x128xf32, #tpu.memory_space<vmem>>) attributes {dimension_semantics = [#tpu.dimension_semantics<parallel>, #tpu.dimension_semantics<parallel>], iteration_bounds = array<i64: 1, 1>, scalar_prefetch = 0 : i64, scratch_operands = 0 : i64, tpu.core_type = #tpu.core_type<tc>, window_params = [{transform_indices = @transform_0, window_bounds = array<i64: 16, 128>}, {transform_indices = @transform_1, window_bounds = array<i64: 16, 128>}]} {
    %c0 = arith.constant 0 : index
    %c0_0 = arith.constant 0 : index
    %0 = vector.load %arg2[%c0, %c0_0] : memref<16x128xf32, #tpu.memory_space<vmem>>, vector<16x128xf32>
    %c0_1 = arith.constant 0 : index
    %c0_2 = arith.constant 0 : index
    %1 = vector.load %arg3[%c0_1, %c0_2] : memref<16x128xf32, #tpu.memory_space<vmem>>, vector<16x128xf32>
    tpu.vector_store %arg3[%c0_1, %c0_2], %0 {strides = array<i32>} : memref<16x128xf32, #tpu.memory_space<vmem>>, vector<16x128xf32>,
    return
  }
  func.func @transform_0(%arg0: i32, %arg1: i32) -> (i32, i32) {
    %c0_i32 = arith.constant 0 : i32
    return %arg0, %arg1 : i32, i32
  }
  func.func @transform_1(%arg0: i32, %arg1: i32) -> (i32, i32) {
    %c0_i32 = arith.constant 0 : i32
    return %arg0, %arg1 : i32, i32
  }
}

</mosaic_0001>

<llo_original>
// kernel: _flatten_extract.1
$region0: #{_flatten_extract.1}
  #allocation0 [shape = 'u32[]', space=smem, size = 0x4, offset = 0x4, fixed_abs, tag = 'smem constant byte address 0x4 - core index']
  #allocation1 [shape = 'u32[144,128]{1,0:T(1,128)}', space=vmem, size = 0x12000, scoped, tag = 'internal scratch']
  %s0 = inlined_call_operand.vmem [shape: f32[16,128], index: 0, kind: input, shape index: {}]
  %s1 = inlined_call_operand.vmem [shape: f32[16,128], index: 1, kind: output, shape index: {}]
  %s2 = sld [smem:[#allocation0]]
  $region14: #{_flatten_extract.1} parent=0
    _
  %s4 = ssub.s32 1, %s2
  %s5 = scalar_select 0, %s4, %s2
  // Predicated region
  $region2: #{_flatten_extract.1} parent=0 // pred_check
    _
  $region3: #{_flatten_extract.1} parent=0 // pred_check_branch
    %7 = sbr.rel (0) target = $region5
  $region4: #{_flatten_extract.1} parent=0 // pred_region
    _
  $region5: #{_flatten_extract.1} parent=0 // pred_fallthru
    _
  %v8 = vld [vmem:[%s0] sm:$0xff]
  %v9 = vld [vmem:[%s0 + $0x8] sm:$0xff]
  %10 = vst [vmem:[%s1] sm:$0xff] %v8
  %11 = vst [vmem:[%s1 + $0x8] sm:$0xff] %v9
  // Predicated region
  $region6: #{_flatten_extract.1} parent=0 // pred_check
    _
  $region7: #{_flatten_extract.1} parent=0 // pred_check_branch
    %13 = sbr.rel (0) target = $region9
  $region8: #{_flatten_extract.1} parent=0 // pred_region
    _
  $region9: #{_flatten_extract.1} parent=0 // pred_fallthru
    _
  // Predicated region
  $region10: #{_flatten_extract.1} parent=0 // pred_check
    _
  $region11: #{_flatten_extract.1} parent=0 // pred_check_branch
    %15 = sbr.rel (0) target = $region13
  $region12: #{_flatten_extract.1} parent=0 // pred_region
    _
  $region13: #{_flatten_extract.1} parent=0 // pred_fallthru
    _

</llo_original>
